<compile_context>
chip_gen: v5e
topology: v5e:2x2
jax: 0.10.0
libtpu: 0.0.40
codegen_flags: <defaults>
</compile_context>

<pallas_src>
import jax
import jax.numpy as jnp
from jax.experimental import pallas as pl
from jax.experimental.pallas import tpu as pltpu


_LANES = 128        # vreg lane width
_TILE_ROWS = 1024   # (1024, 128) f32 tile = 512 KiB per operand


# ---------------------------------------------------------------------------
# Kernels
# ---------------------------------------------------------------------------

def _l1_sum_kernel(pred_ref, tgt_ref, acc_ref):
    # acc_ref: (1, 128) f32, resident across the whole grid (accumulator).
    @pl.when(pl.program_id(0) == 0)
    def _():
        acc_ref[...] = jnp.zeros_like(acc_ref)
    diff = jnp.abs(pred_ref[...] - tgt_ref[...])
    acc_ref[...] += jnp.sum(diff, axis=0, keepdims=True)


def _l1_weighted_sum_kernel(pred_ref, tgt_ref, w_ref, acc_ref):
    @pl.when(pl.program_id(0) == 0)
    def _():
        acc_ref[...] = jnp.zeros_like(acc_ref)
    diff = jnp.abs(pred_ref[...] - tgt_ref[...]) * w_ref[...]
    acc_ref[...] += jnp.sum(diff, axis=0, keepdims=True)


def _l1_elem_kernel(pred_ref, tgt_ref, out_ref):
    out_ref[...] = jnp.abs(pred_ref[...] - tgt_ref[...])


def _l1_weighted_elem_kernel(pred_ref, tgt_ref, w_ref, out_ref):
    out_ref[...] = jnp.abs(pred_ref[...] - tgt_ref[...]) * w_ref[...]


# ---------------------------------------------------------------------------
# Wrappers around pallas_call
# ---------------------------------------------------------------------------

def _prep_lane_dense(x):
    """Flatten + zero-pad an array to a lane-dense (rows, 128) f32 slab."""
    flat = jnp.ravel(jnp.asarray(x, jnp.float32))
    total = flat.shape[0]
    tile_elems = _TILE_ROWS * _LANES
    n_tiles = max(1, -(-total // tile_elems))
    padded = n_tiles * tile_elems
    if padded != total:
        flat = jnp.pad(flat, (0, padded - total))
    return flat.reshape(n_tiles * _TILE_ROWS, _LANES), n_tiles


def _pallas_l1_sum(pred, target, weight):
    """sum(|pred - target| [* weight]) via a tiled, pipelined Pallas kernel."""
    p2d, n_tiles = _prep_lane_dense(pred)
    t2d, _ = _prep_lane_dense(target)
    args = [p2d, t2d]
    kernel = _l1_sum_kernel
    if weight is not None:
        w2d, _ = _prep_lane_dense(weight)
        args.append(w2d)
        kernel = _l1_weighted_sum_kernel

    block = (_TILE_ROWS, _LANES)
    acc = pl.pallas_call(
        kernel,
        out_shape=jax.ShapeDtypeStruct((1, _LANES), jnp.float32),
        grid_spec=pltpu.PrefetchScalarGridSpec(
            num_scalar_prefetch=0,
            grid=(n_tiles,),
            in_specs=[pl.BlockSpec(block, lambda i: (i, 0))] * len(args),
            # Output block index is constant across the grid -> resident
            # accumulator; axis therefore marked "arbitrary".
            out_specs=pl.BlockSpec((1, _LANES), lambda i: (0, 0)),
        ),
        compiler_params=pltpu.CompilerParams(
            dimension_semantics=("arbitrary",)),
    )(*args)
    return jnp.sum(acc)


def _pallas_l1_elementwise(pred, target, weight):
    """Elementwise |pred - target| [* weight] via a tiled Pallas kernel."""
    shape = pred.shape
    total = pred.size
    p2d, n_tiles = _prep_lane_dense(pred)
    t2d, _ = _prep_lane_dense(target)
    args = [p2d, t2d]
    kernel = _l1_elem_kernel
    if weight is not None:
        w2d, _ = _prep_lane_dense(weight)
        args.append(w2d)
        kernel = _l1_weighted_elem_kernel

    block = (_TILE_ROWS, _LANES)
    rows = n_tiles * _TILE_ROWS
    out2d = pl.pallas_call(
        kernel,
        out_shape=jax.ShapeDtypeStruct((rows, _LANES), jnp.float32),
        grid_spec=pltpu.PrefetchScalarGridSpec(
            num_scalar_prefetch=0,
            grid=(n_tiles,),
            in_specs=[pl.BlockSpec(block, lambda i: (i, 0))] * len(args),
            out_specs=pl.BlockSpec(block, lambda i: (i, 0)),
        ),
        compiler_params=pltpu.CompilerParams(
            dimension_semantics=("parallel",)),
    )(*args)
    return out2d.reshape(-1)[:total].reshape(shape)


# ---------------------------------------------------------------------------
# Module-level API (mirrors mmdet's @weighted_loss semantics)
# ---------------------------------------------------------------------------

def pts_l1_loss(pred, target, weight=None, reduction='mean', avg_factor=None):
    """JAX/Pallas equivalent of pts_l1_loss wrapped by @weighted_loss."""
    pred = jnp.asarray(pred, jnp.float32)
    target = jnp.asarray(target, jnp.float32)

    if target.size == 0:
        # torch: return pred.sum() * 0  (scalar zero, reduction is a no-op)
        return jnp.zeros((), jnp.float32)

    assert pred.shape == target.shape
    if weight is not None:
        weight = jnp.broadcast_to(jnp.asarray(weight, jnp.float32), pred.shape)

    if reduction == 'none':
        # avg_factor is ignored for reduction='none' (matches weight_reduce_loss).
        return _pallas_l1_elementwise(pred, target, weight)

    total_sum = _pallas_l1_sum(pred, target, weight)

    if avg_factor is None:
        if reduction == 'mean':
            return total_sum / jnp.float32(pred.size)
        elif reduction == 'sum':
            return total_sum
        else:
            raise ValueError(f'invalid reduction: {reduction}')
    else:
        if reduction == 'mean':
            return total_sum / jnp.float32(avg_factor)
        raise ValueError('avg_factor can not be used with reduction="sum"')


class PtsL1Loss:
    """JAX port of the PyTorch PtsL1Loss module (no parameters)."""

    def __init__(self, reduction='mean', loss_weight=1.0):
        assert reduction in ('none', 'sum', 'mean')
        self.reduction = reduction
        self.loss_weight = loss_weight

    def __call__(self, pred, target, weight=None, avg_factor=None,
                 reduction_override=None):
        assert reduction_override in (None, 'none', 'mean', 'sum')
        reduction = reduction_override if reduction_override else self.reduction
        loss_bbox = self.loss_weight * pts_l1_loss(
            pred, target, weight, reduction=reduction, avg_factor=avg_factor)
        return loss_bbox


# ---------------------------------------------------------------------------
# Self-test
# ---------------------------------------------------------------------------

if __name__ == "__main__":
    key = jax.random.PRNGKey(0)
    k1, k2, k3 = jax.random.split(key, 3)
    num_samples, num_pts, num_coords = 2, 16, 4
    pred = jax.random.normal(k1, (num_samples, num_pts, num_coords), jnp.float32)
    target = jax.random.normal(k2, (num_samples, num_pts, num_coords), jnp.float32)
    weight = jax.random.uniform(k3, (num_samples, num_pts, num_coords), jnp.float32)

    loss_mod = PtsL1Loss(reduction='mean', loss_weight=2.0)

    # 1) mean reduction, no weight
    l_mean = jax.block_until_ready(loss_mod(pred, target))
    ref_mean = 2.0 * jnp.mean(jnp.abs(pred - target))
    assert jnp.allclose(l_mean, ref_mean, rtol=1e-5, atol=1e-6), (l_mean, ref_mean)

    # 2) sum reduction, with weight
    l_sum = jax.block_until_ready(
        loss_mod(pred, target, weight=weight, reduction_override='sum'))
    ref_sum = 2.0 * jnp.sum(jnp.abs(pred - target) * weight)
    assert jnp.allclose(l_sum, ref_sum, rtol=1e-5, atol=1e-5), (l_sum, ref_sum)

    # 3) mean reduction with avg_factor, with weight
    l_avg = jax.block_until_ready(
        loss_mod(pred, target, weight=weight, avg_factor=7.0))
    ref_avg = 2.0 * jnp.sum(jnp.abs(pred - target) * weight) / 7.0
    assert jnp.allclose(l_avg, ref_avg, rtol=1e-5, atol=1e-5), (l_avg, ref_avg)

    # 4) reduction='none' (elementwise), with weight
    l_none = jax.block_until_ready(
        loss_mod(pred, target, weight=weight, reduction_override='none'))
    ref_none = 2.0 * jnp.abs(pred - target) * weight
    assert l_none.shape == pred.shape
    assert jnp.allclose(l_none, ref_none, rtol=1e-5, atol=1e-6)

    # 5) empty target edge case
    l_empty = jax.block_until_ready(
        loss_mod(jnp.zeros((0, num_pts, num_coords), jnp.float32),
                 jnp.zeros((0, num_pts, num_coords), jnp.float32)))
    assert jnp.allclose(l_empty, 0.0)

    print("KERNEL_OK")
</pallas_src>

<mosaic_0001>
module attributes {stable_mosaic.version = 11 : i64} {
  func.func @_l1_sum_kernel(%arg0: i32, %arg1: memref<1024x128xf32, #tpu.memory_space<vmem>>, %arg2: memref<1024x128xf32, #tpu.memory_space<vmem>>, %arg3: memref<1x128xf32, #tpu.memory_space<vmem>>) attributes {dimension_semantics = [#tpu.dimension_semantics<arbitrary>], iteration_bounds = array<i64: 1>, scalar_prefetch = 0 : i64, scratch_operands = 0 : i64, tpu.core_type = #tpu.core_type<tc>, window_params = [{transform_indices = @transform_0, window_bounds = array<i64: 1024, 128>}, {transform_indices = @transform_1, window_bounds = array<i64: 1024, 128>}, {pipeline_mode = #tpu.pipeline_mode<synchronous>, transform_indices = @transform_2, window_bounds = array<i64: 1, 128>}]} {
    %c0_i32 = arith.constant 0 : i32
    %0 = arith.cmpi eq, %arg0, %c0_i32 : i32
    %1 = arith.extui %0 : i1 to i32
    %c0_i32_0 = arith.constant 0 : i32
    %2 = arith.cmpi ne, %1, %c0_i32_0 : i32
    scf.if %2 {
      %cst_8 = arith.constant 0.000000e+00 : f32
      %12 = vector.broadcast %cst_8 : f32 to vector<1x128xf32>
      %c0_9 = arith.constant 0 : index
      %c0_10 = arith.constant 0 : index
      %13 = vector.load %arg3[%c0_9, %c0_10] : memref<1x128xf32, #tpu.memory_space<vmem>>, vector<1x128xf32>
      tpu.vector_store %arg3[%c0_9, %c0_10], %12 {strides = array<i32>} : memref<1x128xf32, #tpu.memory_space<vmem>>, vector<1x128xf32>,
    } else {
    }
    %c0 = arith.constant 0 : index
    %c0_1 = arith.constant 0 : index
    %3 = vector.load %arg1[%c0, %c0_1] : memref<1024x128xf32, #tpu.memory_space<vmem>>, vector<1024x128xf32>
    %c0_2 = arith.constant 0 : index
    %c0_3 = arith.constant 0 : index
    %4 = vector.load %arg2[%c0_2, %c0_3] : memref<1024x128xf32, #tpu.memory_space<vmem>>, vector<1024x128xf32>
    %5 = arith.subf %3, %4 : vector<1024x128xf32>
    %6 = math.absf %5 : vector<1024x128xf32>
    %c0_4 = arith.constant 0 : index
    %c0_5 = arith.constant 0 : index
    %7 = vector.load %arg3[%c0_4, %c0_5] : memref<1x128xf32, #tpu.memory_space<vmem>>, vector<1x128xf32>
    %cst = arith.constant dense<0.000000e+00> : vector<128xf32>
    %8 = vector.multi_reduction <add>, %6, %cst [0] : vector<1024x128xf32> to vector<128xf32>
    %9 = vector.shape_cast %8 : vector<128xf32> to vector<1x128xf32>
    %10 = arith.addf %7, %9 : vector<1x128xf32>
    %c0_6 = arith.constant 0 : index
    %c0_7 = arith.constant 0 : index
    %11 = vector.load %arg3[%c0_6, %c0_7] : memref<1x128xf32, #tpu.memory_space<vmem>>, vector<1x128xf32>
    tpu.vector_store %arg3[%c0_6, %c0_7], %10 {strides = array<i32>} : memref<1x128xf32, #tpu.memory_space<vmem>>, vector<1x128xf32>,
    return
  }
  func.func @transform_0(%arg0: i32) -> (i32, i32) {
    %c0_i32 = arith.constant 0 : i32
    %c0_i32_0 = arith.constant 0 : i32
    return %arg0, %c0_i32 : i32, i32
  }
  func.func @transform_1(%arg0: i32) -> (i32, i32) {
    %c0_i32 = arith.constant 0 : i32
    %c0_i32_0 = arith.constant 0 : i32
    return %arg0, %c0_i32 : i32, i32
  }
  func.func @transform_2(%arg0: i32) -> (i32, i32) {
    %c0_i32 = arith.constant 0 : i32
    %c0_i32_0 = arith.constant 0 : i32
    %c0_i32_1 = arith.constant 0 : i32
    return %c0_i32, %c0_i32_0 : i32, i32
  }
}

</mosaic_0001>

<llo_original>
// kernel: tpu_custom_call.1
$region0: #{tpu_custom_call.1}
  #allocation0 [shape = 'u32[]', space=smem, size = 0x4, offset = 0x4, fixed_abs, tag = 'smem constant byte address 0x4 - core index']
  #allocation1 [shape = 'u32[72,128]{1,0:T(1,128)}', space=vmem, size = 0x9000, scoped, tag = 'internal scratch']
  %s0 = inlined_call_operand.hbm [shape: f32[1024,128], index: 0, kind: input, shape index: {}]
  %s1 = inlined_call_operand.hbm [shape: f32[1024,128], index: 1, kind: input, shape index: {}]
  %s2 = inlined_call_operand.hbm [shape: f32[1,128], index: 2, kind: output, shape index: {}]
  %s3 = sld [smem:[#allocation0]]
  $region30: #{tpu_custom_call.1} parent=0
    _
  %s5 = ssub.s32 1, %s3
  %s6 = scalar_select 0, %s5, %s3
  $region1: #{tpu_custom_call.1} parent=0
    #allocation2 [shape = 'u8[524288]{0}', space=vmem, size = 0x80000, scoped, tag = 'input window, operand 0, single buffered']
    #allocation3 [shape = 's32[1]{0}', space=sflag, size = 0x4, scoped, tag = 'scoped memory for tpu_custom_call.1']
    #allocation4 [shape = 's32[1]{0}', space=sflag, size = 0x4, scoped, tag = 'scoped memory for tpu_custom_call.1']
    #allocation5 [shape = 'u8[524288]{0}', space=vmem, size = 0x80000, scoped, tag = 'input window, operand 1, single buffered']
    #allocation6 [shape = 's32[1]{0}', space=sflag, size = 0x4, scoped, tag = 'scoped memory for tpu_custom_call.1']
    #allocation7 [shape = 'u8[512]{0}', space=vmem, size = 0x400, scoped, tag = 'output window, operand 0, single buffered']
    %7 = vsyncpa [#allocation3], 0
    %8 = vsyncpa [#allocation6], 0
    %9 = vsyncpa [#allocation4], 0
    // Predicated region
    $region2: #{tpu_custom_call.1} parent=1 // pred_check
      _
    $region3: #{tpu_custom_call.1} parent=1 // pred_check_branch
      %11 = sbr.rel (0) target = $region5
    $region4: #{tpu_custom_call.1} parent=1 // pred_region
      %13 = vsyncadd [#allocation3], 0
      %s14 = sshll.u32 %s0, 4
      %s15 = int_to_ptr.hbm [resolvable:$true] %s14
      %s16 = sshll.u32 [#allocation2], 4
      %s17 = int_to_ptr.vmem [resolvable:$true] %s16
      %22 = dma.hbm_to_vmem [thread:$0]  %s15, 16384, %s17, [#allocation3], 128, 128, 8
    $region5: #{tpu_custom_call.1} parent=1 // pred_fallthru
      _
    // Predicated region
    $region6: #{tpu_custom_call.1} parent=1 // pred_check
      _
    $region7: #{tpu_custom_call.1} parent=1 // pred_check_branch
      %24 = sbr.rel (0) target = $region9
    $region8: #{tpu_custom_call.1} parent=1 // pred_region
      %26 = vsyncadd [#allocation6], 0
      %s27 = sshll.u32 %s1, 4
      %s28 = int_to_ptr.hbm [resolvable:$true] %s27
      %s29 = sshll.u32 [#allocation5], 4
      %s30 = int_to_ptr.vmem [resolvable:$true] %s29
      %35 = dma.hbm_to_vmem [thread:$0]  %s28, 16384, %s30, [#allocation6], 128, 128, 8
    $region9: #{tpu_custom_call.1} parent=1 // pred_fallthru
      _
    // Predicated region
    $region10: #{tpu_custom_call.1} parent=1 // pred_check
      _
    $region11: #{tpu_custom_call.1} parent=1 // pred_check_branch
      %37 = sbr.rel (0) target = $region13
    $region12: #{tpu_custom_call.1} parent=1 // pred_region
      %39 = dma.done [#allocation3], 16384
    $region13: #{tpu_custom_call.1} parent=1 // pred_fallthru
      _
    // Predicated region
    $region14: #{tpu_custom_call.1} parent=1 // pred_check
      _
    $region15: #{tpu_custom_call.1} parent=1 // pred_check_branch
      %41 = sbr.rel (0) target = $region17
    $region16: #{tpu_custom_call.1} parent=1 // pred_region
      %43 = dma.done [#allocation6], 16384
    $region17: #{tpu_custom_call.1} parent=1 // pred_fallthru
      _
    %p44 = scmp.eq.s32.totalorder 0, 0
    // Predicated region
    $region18: #{tpu_custom_call.1} parent=1 // pred_check
      %p45 = pneg %p44
    $region19: #{tpu_custom_call.1} parent=1 // pred_check_branch
      %47 = sbr.rel (%p45) target = $region21
    $region20: #{tpu_custom_call.1} parent=1 // pred_region
      %48 = vst [vmem:[#allocation7] sm:$0x1] 0.0
    $region21: #{tpu_custom_call.1} parent=1 // pred_fallthru
      _
    %v49 = vld [vmem:[#allocation2] sm:$0xff]
    %v50 = vld [vmem:[#allocation2 + $0x8] sm:$0xff]
    %v51 = vld [vmem:[#allocation2 + $0x10] sm:$0xff]
    %v52 = vld [vmem:[#allocation2 + $0x18] sm:$0xff]
    %v53 = vld [vmem:[#allocation2 + $0x20] sm:$0xff]
    %v54 = vld [vmem:[#allocation2 + $0x28] sm:$0xff]
    %v55 = vld [vmem:[#allocation2 + $0x30] sm:$0xff]
    %v56 = vld [vmem:[#allocation2 + $0x38] sm:$0xff]
    %v57 = vld [vmem:[#allocation2 + $0x40] sm:$0xff]
    %v58 = vld [vmem:[#allocation2 + $0x48] sm:$0xff]
    %v59 = vld [vmem:[#allocation2 + $0x50] sm:$0xff]
    %v60 = vld [vmem:[#allocation2 + $0x58] sm:$0xff]
    %v61 = vld [vmem:[#allocation2 + $0x60] sm:$0xff]
    %v62 = vld [vmem:[#allocation2 + $0x68] sm:$0xff]
    %v63 = vld [vmem:[#allocation2 + $0x70] sm:$0xff]
    %v64 = vld [vmem:[#allocation2 + $0x78] sm:$0xff]
    %v65 = vld [vmem:[#allocation2 + $0x80] sm:$0xff]
    %v66 = vld [vmem:[#allocation2 + $0x88] sm:$0xff]
    %v67 = vld [vmem:[#allocation2 + $0x90] sm:$0xff]
    %v68 = vld [vmem:[#allocation2 + $0x98] sm:$0xff]
    %v69 = vld [vmem:[#allocation2 + $0xa0] sm:$0xff]
    %v70 = vld [vmem:[#allocation2 + $0xa8] sm:$0xff]
    %v71 = vld [vmem:[#allocation2 + $0xb0] sm:$0xff]
    %v72 = vld [vmem:[#allocation2 + $0xb8] sm:$0xff]
    %v73 = vld [vmem:[#allocation2 + $0xc0] sm:$0xff]
    %v74 = vld [vmem:[#allocation2 + $0xc8] sm:$0xff]
    %v75 = vld [vmem:[#allocation2 + $0xd0] sm:$0xff]
    %v76 = vld [vmem:[#allocation2 + $0xd8] sm:$0xff]
    %v77 = vld [vmem:[#allocation2 + $0xe0] sm:$0xff]
    %v78 = vld [vmem:[#allocation2 + $0xe8] sm:$0xff]
    %v79 = vld [vmem:[#allocation2 + $0xf0] sm:$0xff]
    %v80 = vld [vmem:[#allocation2 + $0xf8] sm:$0xff]
    %v81 = vld [vmem:[#allocation2 + $0x100] sm:$0xff]
    %v82 = vld [vmem:[#allocation2 + $0x108] sm:$0xff]
    %v83 = vld [vmem:[#allocation2 + $0x110] sm:$0xff]
    %v84 = vld [vmem:[#allocation2 + $0x118] sm:$0xff]
    %v85 = vld [vmem:[#allocation2 + $0x120] sm:$0xff]
    %v86 = vld [vmem:[#allocation2 + $0x128] sm:$0xff]
    %v87 = vld [vmem:[#allocation2 + $0x130] sm:$0xff]
    %v88 = vld [vmem:[#allocation2 + $0x138] sm:$0xff]
    %v89 = vld [vmem:[#allocation2 + $0x140] sm:$0xff]
    %v90 = vld [vmem:[#allocation2 + $0x148] sm:$0xff]
    %v91 = vld [vmem:[#allocation2 + $0x150] sm:$0xff]
    %v92 = vld [vmem:[#allocation2 + $0x158] sm:$0xff]
    %v93 = vld [vmem:[#allocation2 + $0x160] sm:$0xff]
    %v94 = vld [vmem:[#allocation2 + $0x168] sm:$0xff]
    %v95 = vld [vmem:[#allocation2 + $0x170] sm:$0xff]
    %v96 = vld [vmem:[#allocation2 + $0x178] sm:$0xff]
    %v97 = vld [vmem:[#allocation2 + $0x180] sm:$0xff]
    %v98 = vld [vmem:[#allocation2 + $0x188] sm:$0xff]
    %v99 = vld [vmem:[#allocation2 + $0x190] sm:$0xff]
    %v100 = vld [vmem:[#allocation2 + $0x198] sm:$0xff]
    %v101 = vld [vmem:[#allocation2 + $0x1a0] sm:$0xff]
    %v102 = vld [vmem:[#allocation2 + $0x1a8] sm:$0xff]
    %v103 = vld [vmem:[#allocation2 + $0x1b0] sm:$0xff]
    %v104 = vld [vmem:[#allocation2 + $0x1b8] sm:$0xff]
    %v105 = vld [vmem:[#allocation2 + $0x1c0] sm:$0xff]
    %v106 = vld [vmem:[#allocation2 + $0x1c8] sm:$0xff]
    %v107 = vld [vmem:[#allocation2 + $0x1d0] sm:$0xff]
    %v108 = vld [vmem:[#allocation2 + $0x1d8] sm:$0xff]
    %v109 = vld [vmem:[#allocation2 + $0x1e0] sm:$0xff]
    %v110 = vld [vmem:[#allocation2 + $0x1e8] sm:$0xff]
    %v111 = vld [vmem:[#allocation2 + $0x1f0] sm:$0xff]
    %v112 = vld [vmem:[#allocation2 + $0x1f8] sm:$0xff]
    %v113 = vld [vmem:[#allocation2 + $0x200] sm:$0xff]
    %v114 = vld [vmem:[#allocation2 + $0x208] sm:$0xff]
    %v115 = vld [vmem:[#allocation2 + $0x210] sm:$0xff]
    %v116 = vld [vmem:[#allocation2 + $0x218] sm:$0xff]
    %v117 = vld [vmem:[#allocation2 + $0x220] sm:$0xff]
    %v118 = vld [vmem:[#allocation2 + $0x228] sm:$0xff]
    %v119 = vld [vmem:[#allocation2 + $0x230] sm:$0xff]
    %v120 = vld [vmem:[#allocation2 + $0x238] sm:$0xff]
    %v121 = vld [vmem:[#allocation2 + $0x240] sm:$0xff]
    %v122 = vld [vmem:[#allocation2 + $0x248] sm:$0xff]
    %v123 = vld [vmem:[#allocation2 + $0x250] sm:$0xff]
    %v124 = vld [vmem:[#allocation2 + $0x258] sm:$0xff]
    %v125 = vld [vmem:[#allocation2 + $0x260] sm:$0xff]
    %v126 = vld [vmem:[#allocation2 + $0x268] sm:$0xff]
    %v127 = vld [vmem:[#allocation2 + $0x270] sm:$0xff]
    %v128 = vld [vmem:[#allocation2 + $0x278] sm:$0xff]
    %v129 = vld [vmem:[#allocation2 + $0x280] sm:$0xff]
    %v130 = vld [vmem:[#allocation2 + $0x288] sm:$0xff]
    %v131 = vld [vmem:[#allocation2 + $0x290] sm:$0xff]
    %v132 = vld [vmem:[#allocation2 + $0x298] sm:$0xff]
    %v133 = vld [vmem:[#allocation2 + $0x2a0] sm:$0xff]
    %v134 = vld [vmem:[#allocation2 + $0x2a8] sm:$0xff]
    %v135 = vld [vmem:[#allocation2 + $0x2b0] sm:$0xff]
    %v136 = vld [vmem:[#allocation2 + $0x2b8] sm:$0xff]
    %v137 = vld [vmem:[#allocation2 + $0x2c0] sm:$0xff]
    %v138 = vld [vmem:[#allocation2 + $0x2c8] sm:$0xff]
    %v139 = vld [vmem:[#allocation2 + $0x2d0] sm:$0xff]
    %v140 = vld [vmem:[#allocation2 + $0x2d8] sm:$0xff]
    %v141 = vld [vmem:[#allocation2 + $0x2e0] sm:$0xff]
    %v142 = vld [vmem:[#allocation2 + $0x2e8] sm:$0xff]
    %v143 = vld [vmem:[#allocation2 + $0x2f0] sm:$0xff]
    %v144 = vld [vmem:[#allocation2 + $0x2f8] sm:$0xff]
    %v145 = vld [vmem:[#allocation2 + $0x300] sm:$0xff]
    %v146 = vld [vmem:[#allocation2 + $0x308] sm:$0xff]
    %v147 = vld [vmem:[#allocation2 + $0x310] sm:$0xff]
    %v148 = vld [vmem:[#allocation2 + $0x318] sm:$0xff]
    %v149 = vld [vmem:[#allocation2 + $0x320] sm:$0xff]
    %v150 = vld [vmem:[#allocation2 + $0x328] sm:$0xff]
    %v151 = vld [vmem:[#allocation2 + $0x330] sm:$0xff]
    %v152 = vld [vmem:[#allocation2 + $0x338] sm:$0xff]
    %v153 = vld [vmem:[#allocation2 + $0x340] sm:$0xff]
    %v154 = vld [vmem:[#allocation2 + $0x348] sm:$0xff]
    %v155 = vld [vmem:[#allocation2 + $0x350] sm:$0xff]
    %v156 = vld [vmem:[#allocation2 + $0x358] sm:$0xff]
    %v157 = vld [vmem:[#allocation2 + $0x360] sm:$0xff]
    %v158 = vld [vmem:[#allocation2 + $0x368] sm:$0xff]
    %v159 = vld [vmem:[#allocation2 + $0x370] sm:$0xff]
    %v160 = vld [vmem:[#allocation2 + $0x378] sm:$0xff]
    %v161 = vld [vmem:[#allocation2 + $0x380] sm:$0xff]
    %v162 = vld [vmem:[#allocation2 + $0x388] sm:$0xff]
    %v163 = vld [vmem:[#allocation2 + $0x390] sm:$0xff]
    %v164 = vld [vmem:[#allocation2 + $0x398] sm:$0xff]
    %v165 = vld [vmem:[#allocation2 + $0x3a0] sm:$0xff]
    %v166 = vld [vmem:[#allocation2 + $0x3a8] sm:$0xff]
    %v167 = vld [vmem:[#allocation2 + $0x3b0] sm:$0xff]
    %v168 = vld [vmem:[#allocation2 + $0x3b8] sm:$0xff]
    %v169 = vld [vmem:[#allocation2 + $0x3c0] sm:$0xff]
    %v170 = vld [vmem:[#allocation2 + $0x3c8] sm:$0xff]
    %v171 = vld [vmem:[#allocation2 + $0x3d0] sm:$0xff]
    %v172 = vld [vmem:[#allocation2 + $0x3d8] sm:$0xff]
    %v173 = vld [vmem:[#allocation2 + $0x3e0] sm:$0xff]
    %v174 = vld [vmem:[#allocation2 + $0x3e8] sm:$0xff]
    %v175 = vld [vmem:[#allocation2 + $0x3f0] sm:$0xff]
    %v176 = vld [vmem:[#allocation2 + $0x3f8] sm:$0xff]
    %v177 = vld [vmem:[#allocation5] sm:$0xff]
    %v178 = vld [vmem:[#allocation5 + $0x8] sm:$0xff]
    %v179 = vld [vmem:[#allocation5 + $0x10] sm:$0xff]
    %v180 = vld [vmem:[#allocation5 + $0x18] sm:$0xff]
    %v181 = vld [vmem:[#allocation5 + $0x20] sm:$0xff]
    %v182 = vld [vmem:[#allocation5 + $0x28] sm:$0xff]
    %v183 = vld [vmem:[#allocation5 + $0x30] sm:$0xff]
    %v184 = vld [vmem:[#allocation5 + $0x38] sm:$0xff]
    %v185 = vld [vmem:[#allocation5 + $0x40] sm:$0xff]
    %v186 = vld [vmem:[#allocation5 + $0x48] sm:$0xff]
    %v187 = vld [vmem:[#allocation5 + $0x50] sm:$0xff]
    %v188 = vld [vmem:[#allocation5 + $0x58] sm:$0xff]
    %v189 = vld [vmem:[#allocation5 + $0x60] sm:$0xff]
    %v190 = vld [vmem:[#allocation5 + $0x68] sm:$0xff]
    %v191 = vld [vmem:[#allocation5 + $0x70] sm:$0xff]
    %v192 = vld [vmem:[#allocation5 + $0x78] sm:$0xff]
    %v193 = vld [vmem:[#allocation5 + $0x80] sm:$0xff]
    %v194 = vld [vmem:[#allocation5 + $0x88] sm:$0xff]
    %v195 = vld [vmem:[#allocation5 + $0x90] sm:$0xff]
    %v196 = vld [vmem:[#allocation5 + $0x98] sm:$0xff]
    %v197 = vld [vmem:[#allocation5 + $0xa0] sm:$0xff]
    %v198 = vld [vmem:[#allocation5 + $0xa8] sm:$0xff]
    %v199 = vld [vmem:[#allocation5 + $0xb0] sm:$0xff]
    %v200 = vld [vmem:[#allocation5 + $0xb8] sm:$0xff]
    %v201 = vld [vmem:[#allocation5 + $0xc0] sm:$0xff]
    %v202 = vld [vmem:[#allocation5 + $0xc8] sm:$0xff]
    %v203 = vld [vmem:[#allocation5 + $0xd0] sm:$0xff]
    %v204 = vld [vmem:[#allocation5 + $0xd8] sm:$0xff]
    %v205 = vld [vmem:[#allocation5 + $0xe0] sm:$0xff]
    %v206 = vld [vmem:[#allocation5 + $0xe8] sm:$0xff]
    %v207 = vld [vmem:[#allocation5 + $0xf0] sm:$0xff]
    %v208 = vld [vmem:[#allocation5 + $0xf8] sm:$0xff]
    %v209 = vld [vmem:[#allocation5 + $0x100] sm:$0xff]
    %v210 = vld [vmem:[#allocation5 + $0x108] sm:$0xff]
    %v211 = vld [vmem:[#allocation5 + $0x110] sm:$0xff]
    %v212 = vld [vmem:[#allocation5 + $0x118] sm:$0xff]
    %v213 = vld [vmem:[#allocation5 + $0x120] sm:$0xff]
    %v214 = vld [vmem:[#allocation5 + $0x128] sm:$0xff]
    %v215 = vld [vmem:[#allocation5 + $0x130] sm:$0xff]
    %v216 = vld [vmem:[#allocation5 + $0x138] sm:$0xff]
    %v217 = vld [vmem:[#allocation5 + $0x140] sm:$0xff]
    %v218 = vld [vmem:[#allocation5 + $0x148] sm:$0xff]
    %v219 = vld [vmem:[#allocation5 + $0x150] sm:$0xff]
    %v220 = vld [vmem:[#allocation5 + $0x158] sm:$0xff]
    %v221 = vld [vmem:[#allocation5 + $0x160] sm:$0xff]
    %v222 = vld [vmem:[#allocation5 + $0x168] sm:$0xff]
    %v223 = vld [vmem:[#allocation5 + $0x170] sm:$0xff]
    %v224 = vld [vmem:[#allocation5 + $0x178] sm:$0xff]
    %v225 = vld [vmem:[#allocation5 + $0x180] sm:$0xff]
    %v226 = vld [vmem:[#allocation5 + $0x188] sm:$0xff]
    %v227 = vld [vmem:[#allocation5 + $0x190] sm:$0xff]
    %v228 = vld [vmem:[#allocation5 + $0x198] sm:$0xff]
    %v229 = vld [vmem:[#allocation5 + $0x1a0] sm:$0xff]
    %v230 = vld [vmem:[#allocation5 + $0x1a8] sm:$0xff]
    %v231 = vld [vmem:[#allocation5 + $0x1b0] sm:$0xff]
    %v232 = vld [vmem:[#allocation5 + $0x1b8] sm:$0xff]
    %v233 = vld [vmem:[#allocation5 + $0x1c0] sm:$0xff]
    %v234 = vld [vmem:[#allocation5 + $0x1c8] sm:$0xff]
    %v235 = vld [vmem:[#allocation5 + $0x1d0] sm:$0xff]
    %v236 = vld [vmem:[#allocation5 + $0x1d8] sm:$0xff]
    %v237 = vld [vmem:[#allocation5 + $0x1e0] sm:$0xff]
    %v238 = vld [vmem:[#allocation5 + $0x1e8] sm:$0xff]
    %v239 = vld [vmem:[#allocation5 + $0x1f0] sm:$0xff]
    %v240 = vld [vmem:[#allocation5 + $0x1f8] sm:$0xff]
    %v241 = vld [vmem:[#allocation5 + $0x200] sm:$0xff]
    %v242 = vld [vmem:[#allocation5 + $0x208] sm:$0xff]
    %v243 = vld [vmem:[#allocation5 + $0x210] sm:$0xff]
    %v244 = vld [vmem:[#allocation5 + $0x218] sm:$0xff]
    %v245 = vld [vmem:[#allocation5 + $0x220] sm:$0xff]
    %v246 = vld [vmem:[#allocation5 + $0x228] sm:$0xff]
    %v247 = vld [vmem:[#allocation5 + $0x230] sm:$0xff]
    %v248 = vld [vmem:[#allocation5 + $0x238] sm:$0xff]
    %v249 = vld [vmem:[#allocation5 + $0x240] sm:$0xff]
    %v250 = vld [vmem:[#allocation5 + $0x248] sm:$0xff]
    %v251 = vld [vmem:[#allocation5 + $0x250] sm:$0xff]
    %v252 = vld [vmem:[#allocation5 + $0x258] sm:$0xff]
    %v253 = vld [vmem:[#allocation5 + $0x260] sm:$0xff]
    %v254 = vld [vmem:[#allocation5 + $0x268] sm:$0xff]
    %v255 = vld [vmem:[#allocation5 + $0x270] sm:$0xff]
    %v256 = vld [vmem:[#allocation5 + $0x278] sm:$0xff]
    %v257 = vld [vmem:[#allocation5 + $0x280] sm:$0xff]
    %v258 = vld [vmem:[#allocation5 + $0x288] sm:$0xff]
    %v259 = vld [vmem:[#allocation5 + $0x290] sm:$0xff]
    %v260 = vld [vmem:[#allocation5 + $0x298] sm:$0xff]
    %v261 = vld [vmem:[#allocation5 + $0x2a0] sm:$0xff]
    %v262 = vld [vmem:[#allocation5 + $0x2a8] sm:$0xff]
    %v263 = vld [vmem:[#allocation5 + $0x2b0] sm:$0xff]
    %v264 = vld [vmem:[#allocation5 + $0x2b8] sm:$0xff]
    %v265 = vld [vmem:[#allocation5 + $0x2c0] sm:$0xff]
    %v266 = vld [vmem:[#allocation5 + $0x2c8] sm:$0xff]
    %v267 = vld [vmem:[#allocation5 + $0x2d0] sm:$0xff]
    %v268 = vld [vmem:[#allocation5 + $0x2d8] sm:$0xff]
    %v269 = vld [vmem:[#allocation5 + $0x2e0] sm:$0xff]
    %v270 = vld [vmem:[#allocation5 + $0x2e8] sm:$0xff]
    %v271 = vld [vmem:[#allocation5 + $0x2f0] sm:$0xff]
    %v272 = vld [vmem:[#allocation5 + $0x2f8] sm:$0xff]
    %v273 = vld [vmem:[#allocation5 + $0x300] sm:$0xff]
    %v274 = vld [vmem:[#allocation5 + $0x308] sm:$0xff]
    %v275 = vld [vmem:[#allocation5 + $0x310] sm:$0xff]
    %v276 = vld [vmem:[#allocation5 + $0x318] sm:$0xff]
    %v277 = vld [vmem:[#allocation5 + $0x320] sm:$0xff]
    %v278 = vld [vmem:[#allocation5 + $0x328] sm:$0xff]
    %v279 = vld [vmem:[#allocation5 + $0x330] sm:$0xff]
    %v280 = vld [vmem:[#allocation5 + $0x338] sm:$0xff]
    %v281 = vld [vmem:[#allocation5 + $0x340] sm:$0xff]
    %v282 = vld [vmem:[#allocation5 + $0x348] sm:$0xff]
    %v283 = vld [vmem:[#allocation5 + $0x350] sm:$0xff]
    %v284 = vld [vmem:[#allocation5 + $0x358] sm:$0xff]
    %v285 = vld [vmem:[#allocation5 + $0x360] sm:$0xff]
    %v286 = vld [vmem:[#allocation5 + $0x368] sm:$0xff]
    %v287 = vld [vmem:[#allocation5 + $0x370] sm:$0xff]
    %v288 = vld [vmem:[#allocation5 + $0x378] sm:$0xff]
    %v289 = vld [vmem:[#allocation5 + $0x380] sm:$0xff]
    %v290 = vld [vmem:[#allocation5 + $0x388] sm:$0xff]
    %v291 = vld [vmem:[#allocation5 + $0x390] sm:$0xff]
    %v292 = vld [vmem:[#allocation5 + $0x398] sm:$0xff]
    %v293 = vld [vmem:[#allocation5 + $0x3a0] sm:$0xff]
    %v294 = vld [vmem:[#allocation5 + $0x3a8] sm:$0xff]
    %v295 = vld [vmem:[#allocation5 + $0x3b0] sm:$0xff]
    %v296 = vld [vmem:[#allocation5 + $0x3b8] sm:$0xff]
    %v297 = vld [vmem:[#allocation5 + $0x3c0] sm:$0xff]
    %v298 = vld [vmem:[#allocation5 + $0x3c8] sm:$0xff]
    %v299 = vld [vmem:[#allocation5 + $0x3d0] sm:$0xff]
    %v300 = vld [vmem:[#allocation5 + $0x3d8] sm:$0xff]
    %v301 = vld [vmem:[#allocation5 + $0x3e0] sm:$0xff]
    %v302 = vld [vmem:[#allocation5 + $0x3e8] sm:$0xff]
    %v303 = vld [vmem:[#allocation5 + $0x3f0] sm:$0xff]
    %v304 = vld [vmem:[#allocation5 + $0x3f8] sm:$0xff]
    %v305 = vsub.f32 %v49, %v177
    %v306 = vsub.f32 %v50, %v178
    %v307 = vsub.f32 %v51, %v179
    %v308 = vsub.f32 %v52, %v180
    %v309 = vsub.f32 %v53, %v181
    %v310 = vsub.f32 %v54, %v182
    %v311 = vsub.f32 %v55, %v183
    %v312 = vsub.f32 %v56, %v184
    %v313 = vsub.f32 %v57, %v185
    %v314 = vsub.f32 %v58, %v186
    %v315 = vsub.f32 %v59, %v187
    %v316 = vsub.f32 %v60, %v188
    %v317 = vsub.f32 %v61, %v189
    %v318 = vsub.f32 %v62, %v190
    %v319 = vsub.f32 %v63, %v191
    %v320 = vsub.f32 %v64, %v192
    %v321 = vsub.f32 %v65, %v193
    %v322 = vsub.f32 %v66, %v194
    %v323 = vsub.f32 %v67, %v195
    %v324 = vsub.f32 %v68, %v196
    %v325 = vsub.f32 %v69, %v197
    %v326 = vsub.f32 %v70, %v198
    %v327 = vsub.f32 %v71, %v199
    %v328 = vsub.f32 %v72, %v200
    %v329 = vsub.f32 %v73, %v201
    %v330 = vsub.f32 %v74, %v202
    %v331 = vsub.f32 %v75, %v203
    %v332 = vsub.f32 %v76, %v204
    %v333 = vsub.f32 %v77, %v205
    %v334 = vsub.f32 %v78, %v206
    %v335 = vsub.f32 %v79, %v207
    %v336 = vsub.f32 %v80, %v208
    %v337 = vsub.f32 %v81, %v209
    %v338 = vsub.f32 %v82, %v210
    %v339 = vsub.f32 %v83, %v211
    %v340 = vsub.f32 %v84, %v212
    %v341 = vsub.f32 %v85, %v213
    %v342 = vsub.f32 %v86, %v214
    %v343 = vsub.f32 %v87, %v215
    %v344 = vsub.f32 %v88, %v216
    %v345 = vsub.f32 %v89, %v217
    %v346 = vsub.f32 %v90, %v218
    %v347 = vsub.f32 %v91, %v219
    %v348 = vsub.f32 %v92, %v220
    %v349 = vsub.f32 %v93, %v221
    %v350 = vsub.f32 %v94, %v222
    %v351 = vsub.f32 %v95, %v223
    %v352 = vsub.f32 %v96, %v224
    %v353 = vsub.f32 %v97, %v225
    %v354 = vsub.f32 %v98, %v226
    %v355 = vsub.f32 %v99, %v227
    %v356 = vsub.f32 %v100, %v228
    %v357 = vsub.f32 %v101, %v229
    %v358 = vsub.f32 %v102, %v230
    %v359 = vsub.f32 %v103, %v231
    %v360 = vsub.f32 %v104, %v232
    %v361 = vsub.f32 %v105, %v233
    %v362 = vsub.f32 %v106, %v234
    %v363 = vsub.f32 %v107, %v235
    %v364 = vsub.f32 %v108, %v236
    %v365 = vsub.f32 %v109, %v237
    %v366 = vsub.f32 %v110, %v238
    %v367 = vsub.f32 %v111, %v239
    %v368 = vsub.f32 %v112, %v240
    %v369 = vsub.f32 %v113, %v241
    %v370 = vsub.f32 %v114, %v242
    %v371 = vsub.f32 %v115, %v243
    %v372 = vsub.f32 %v116, %v244
    %v373 = vsub.f32 %v117, %v245
    %v374 = vsub.f32 %v118, %v246
    %v375 = vsub.f32 %v119, %v247
    %v376 = vsub.f32 %v120, %v248
    %v377 = vsub.f32 %v121, %v249
    %v378 = vsub.f32 %v122, %v250
    %v379 = vsub.f32 %v123, %v251
    %v380 = vsub.f32 %v124, %v252
    %v381 = vsub.f32 %v125, %v253
    %v382 = vsub.f32 %v126, %v254
    %v383 = vsub.f32 %v127, %v255
    %v384 = vsub.f32 %v128, %v256
    %v385 = vsub.f32 %v129, %v257
    %v386 = vsub.f32 %v130, %v258
    %v387 = vsub.f32 %v131, %v259
    %v388 = vsub.f32 %v132, %v260
    %v389 = vsub.f32 %v133, %v261
    %v390 = vsub.f32 %v134, %v262
    %v391 = vsub.f32 %v135, %v263
    %v392 = vsub.f32 %v136, %v264
    %v393 = vsub.f32 %v137, %v265
    %v394 = vsub.f32 %v138, %v266
    %v395 = vsub.f32 %v139, %v267
    %v396 = vsub.f32 %v140, %v268
    %v397 = vsub.f32 %v141, %v269
    %v398 = vsub.f32 %v142, %v270
    %v399 = vsub.f32 %v143, %v271
    %v400 = vsub.f32 %v144, %v272
    %v401 = vsub.f32 %v145, %v273
    %v402 = vsub.f32 %v146, %v274
    %v403 = vsub.f32 %v147, %v275
    %v404 = vsub.f32 %v148, %v276
    %v405 = vsub.f32 %v149, %v277
    %v406 = vsub.f32 %v150, %v278
    %v407 = vsub.f32 %v151, %v279
    %v408 = vsub.f32 %v152, %v280
    %v409 = vsub.f32 %v153, %v281
    %v410 = vsub.f32 %v154, %v282
    %v411 = vsub.f32 %v155, %v283
    %v412 = vsub.f32 %v156, %v284
    %v413 = vsub.f32 %v157, %v285
    %v414 = vsub.f32 %v158, %v286
    %v415 = vsub.f32 %v159, %v287
    %v416 = vsub.f32 %v160, %v288
    %v417 = vsub.f32 %v161, %v289
    %v418 = vsub.f32 %v162, %v290
    %v419 = vsub.f32 %v163, %v291
    %v420 = vsub.f32 %v164, %v292
    %v421 = vsub.f32 %v165, %v293
    %v422 = vsub.f32 %v166, %v294
    %v423 = vsub.f32 %v167, %v295
    %v424 = vsub.f32 %v168, %v296
    %v425 = vsub.f32 %v169, %v297
    %v426 = vsub.f32 %v170, %v298
    %v427 = vsub.f32 %v171, %v299
    %v428 = vsub.f32 %v172, %v300
    %v429 = vsub.f32 %v173, %v301
    %v430 = vsub.f32 %v174, %v302
    %v431 = vsub.f32 %v175, %v303
    %v432 = vsub.f32 %v176, %v304
    %v433 = vand.u32 2147483647, %v305
    %v434 = vand.u32 2147483647, %v306
    %v435 = vand.u32 2147483647, %v307
    %v436 = vand.u32 2147483647, %v308
    %v437 = vand.u32 2147483647, %v309
    %v438 = vand.u32 2147483647, %v310
    %v439 = vand.u32 2147483647, %v311
    %v440 = vand.u32 2147483647, %v312
    %v441 = vand.u32 2147483647, %v313
    %v442 = vand.u32 2147483647, %v314
    %v443 = vand.u32 2147483647, %v315
    %v444 = vand.u32 2147483647, %v316
    %v445 = vand.u32 2147483647, %v317
    %v446 = vand.u32 2147483647, %v318
    %v447 = vand.u32 2147483647, %v319
    %v448 = vand.u32 2147483647, %v320
    %v449 = vand.u32 2147483647, %v321
    %v450 = vand.u32 2147483647, %v322
    %v451 = vand.u32 2147483647, %v323
    %v452 = vand.u32 2147483647, %v324
    %v453 = vand.u32 2147483647, %v325
    %v454 = vand.u32 2147483647, %v326
    %v455 = vand.u32 2147483647, %v327
    %v456 = vand.u32 2147483647, %v328
    %v457 = vand.u32 2147483647, %v329
    %v458 = vand.u32 2147483647, %v330
    %v459 = vand.u32 2147483647, %v331
    %v460 = vand.u32 2147483647, %v332
    %v461 = vand.u32 2147483647, %v333
    %v462 = vand.u32 2147483647, %v334
    %v463 = vand.u32 2147483647, %v335
    %v464 = vand.u32 2147483647, %v336
    %v465 = vand.u32 2147483647, %v337
    %v466 = vand.u32 2147483647, %v338
    %v467 = vand.u32 2147483647, %v339
    %v468 = vand.u32 2147483647, %v340
    %v469 = vand.u32 2147483647, %v341
    %v470 = vand.u32 2147483647, %v342
    %v471 = vand.u32 2147483647, %v343
    %v472 = vand.u32 2147483647, %v344
    %v473 = vand.u32 2147483647, %v345
    %v474 = vand.u32 2147483647, %v346
    %v475 = vand.u32 2147483647, %v347
    %v476 = vand.u32 2147483647, %v348
    %v477 = vand.u32 2147483647, %v349
    %v478 = vand.u32 2147483647, %v350
    %v479 = vand.u32 2147483647, %v351
    %v480 = vand.u32 2147483647, %v352
    %v481 = vand.u32 2147483647, %v353
    %v482 = vand.u32 2147483647, %v354
    %v483 = vand.u32 2147483647, %v355
    %v484 = vand.u32 2147483647, %v356
    %v485 = vand.u32 2147483647, %v357
    %v486 = vand.u32 2147483647, %v358
    %v487 = vand.u32 2147483647, %v359
    %v488 = vand.u32 2147483647, %v360
    %v489 = vand.u32 2147483647, %v361
    %v490 = vand.u32 2147483647, %v362
    %v491 = vand.u32 2147483647, %v363
    %v492 = vand.u32 2147483647, %v364
    %v493 = vand.u32 2147483647, %v365
    %v494 = vand.u32 2147483647, %v366
    %v495 = vand.u32 2147483647, %v367
    %v496 = vand.u32 2147483647, %v368
    %v497 = vand.u32 2147483647, %v369
    %v498 = vand.u32 2147483647, %v370
    %v499 = vand.u32 2147483647, %v371
    %v500 = vand.u32 2147483647, %v372
    %v501 = vand.u32 2147483647, %v373
    %v502 = vand.u32 2147483647, %v374
    %v503 = vand.u32 2147483647, %v375
    %v504 = vand.u32 2147483647, %v376
    %v505 = vand.u32 2147483647, %v377
    %v506 = vand.u32 2147483647, %v378
    %v507 = vand.u32 2147483647, %v379
    %v508 = vand.u32 2147483647, %v380
    %v509 = vand.u32 2147483647, %v381
    %v510 = vand.u32 2147483647, %v382
    %v511 = vand.u32 2147483647, %v383
    %v512 = vand.u32 2147483647, %v384
    %v513 = vand.u32 2147483647, %v385
    %v514 = vand.u32 2147483647, %v386
    %v515 = vand.u32 2147483647, %v387
    %v516 = vand.u32 2147483647, %v388
    %v517 = vand.u32 2147483647, %v389
    %v518 = vand.u32 2147483647, %v390
    %v519 = vand.u32 2147483647, %v391
    %v520 = vand.u32 2147483647, %v392
    %v521 = vand.u32 2147483647, %v393
    %v522 = vand.u32 2147483647, %v394
    %v523 = vand.u32 2147483647, %v395
    %v524 = vand.u32 2147483647, %v396
    %v525 = vand.u32 2147483647, %v397
    %v526 = vand.u32 2147483647, %v398
    %v527 = vand.u32 2147483647, %v399
    %v528 = vand.u32 2147483647, %v400
    %v529 = vand.u32 2147483647, %v401
    %v530 = vand.u32 2147483647, %v402
    %v531 = vand.u32 2147483647, %v403
    %v532 = vand.u32 2147483647, %v404
    %v533 = vand.u32 2147483647, %v405
    %v534 = vand.u32 2147483647, %v406
    %v535 = vand.u32 2147483647, %v407
    %v536 = vand.u32 2147483647, %v408
    %v537 = vand.u32 2147483647, %v409
    %v538 = vand.u32 2147483647, %v410
    %v539 = vand.u32 2147483647, %v411
    %v540 = vand.u32 2147483647, %v412
    %v541 = vand.u32 2147483647, %v413
    %v542 = vand.u32 2147483647, %v414
    %v543 = vand.u32 2147483647, %v415
    %v544 = vand.u32 2147483647, %v416
    %v545 = vand.u32 2147483647, %v417
    %v546 = vand.u32 2147483647, %v418
    %v547 = vand.u32 2147483647, %v419
    %v548 = vand.u32 2147483647, %v420
    %v549 = vand.u32 2147483647, %v421
    %v550 = vand.u32 2147483647, %v422
    %v551 = vand.u32 2147483647, %v423
    %v552 = vand.u32 2147483647, %v424
    %v553 = vand.u32 2147483647, %v425
    %v554 = vand.u32 2147483647, %v426
    %v555 = vand.u32 2147483647, %v427
    %v556 = vand.u32 2147483647, %v428
    %v557 = vand.u32 2147483647, %v429
    %v558 = vand.u32 2147483647, %v430
    %v559 = vand.u32 2147483647, %v431
    %v560 = vand.u32 2147483647, %v432
    %v561 = vld [vmem:[#allocation7] sm:$0x1]
    %v562 = vadd.f32 %v433, %v434
    %v563 = vadd.f32 %v562, %v435
    %v564 = vadd.f32 %v563, %v436
    %v565 = vadd.f32 %v564, %v437
    %v566 = vadd.f32 %v565, %v438
    %v567 = vadd.f32 %v566, %v439
    %v568 = vadd.f32 %v567, %v440
    %v569 = vadd.f32 %v568, %v441
    %v570 = vadd.f32 %v569, %v442
    %v571 = vadd.f32 %v570, %v443
    %v572 = vadd.f32 %v571, %v444
    %v573 = vadd.f32 %v572, %v445
    %v574 = vadd.f32 %v573, %v446
    %v575 = vadd.f32 %v574, %v447
    %v576 = vadd.f32 %v575, %v448
    %v577 = vadd.f32 %v576, %v449
    %v578 = vadd.f32 %v577, %v450
    %v579 = vadd.f32 %v578, %v451
    %v580 = vadd.f32 %v579, %v452
    %v581 = vadd.f32 %v580, %v453
    %v582 = vadd.f32 %v581, %v454
    %v583 = vadd.f32 %v582, %v455
    %v584 = vadd.f32 %v583, %v456
    %v585 = vadd.f32 %v584, %v457
    %v586 = vadd.f32 %v585, %v458
    %v587 = vadd.f32 %v586, %v459
    %v588 = vadd.f32 %v587, %v460
    %v589 = vadd.f32 %v588, %v461
    %v590 = vadd.f32 %v589, %v462
    %v591 = vadd.f32 %v590, %v463
    %v592 = vadd.f32 %v591, %v464
    %v593 = vadd.f32 %v592, %v465
    %v594 = vadd.f32 %v593, %v466
    %v595 = vadd.f32 %v594, %v467
    %v596 = vadd.f32 %v595, %v468
    %v597 = vadd.f32 %v596, %v469
    %v598 = vadd.f32 %v597, %v470
    %v599 = vadd.f32 %v598, %v471
    %v600 = vadd.f32 %v599, %v472
    %v601 = vadd.f32 %v600, %v473
    %v602 = vadd.f32 %v601, %v474
    %v603 = vadd.f32 %v602, %v475
    %v604 = vadd.f32 %v603, %v476
    %v605 = vadd.f32 %v604, %v477
    %v606 = vadd.f32 %v605, %v478
    %v607 = vadd.f32 %v606, %v479
    %v608 = vadd.f32 %v607, %v480
    %v609 = vadd.f32 %v608, %v481
    %v610 = vadd.f32 %v609, %v482
    %v611 = vadd.f32 %v610, %v483
    %v612 = vadd.f32 %v611, %v484
    %v613 = vadd.f32 %v612, %v485
    %v614 = vadd.f32 %v613, %v486
    %v615 = vadd.f32 %v614, %v487
    %v616 = vadd.f32 %v615, %v488
    %v617 = vadd.f32 %v616, %v489
    %v618 = vadd.f32 %v617, %v490
    %v619 = vadd.f32 %v618, %v491
    %v620 = vadd.f32 %v619, %v492
    %v621 = vadd.f32 %v620, %v493
    %v622 = vadd.f32 %v621, %v494
    %v623 = vadd.f32 %v622, %v495
    %v624 = vadd.f32 %v623, %v496
    %v625 = vadd.f32 %v624, %v497
    %v626 = vadd.f32 %v625, %v498
    %v627 = vadd.f32 %v626, %v499
    %v628 = vadd.f32 %v627, %v500
    %v629 = vadd.f32 %v628, %v501
    %v630 = vadd.f32 %v629, %v502
    %v631 = vadd.f32 %v630, %v503
    %v632 = vadd.f32 %v631, %v504
    %v633 = vadd.f32 %v632, %v505
    %v634 = vadd.f32 %v633, %v506
    %v635 = vadd.f32 %v634, %v507
    %v636 = vadd.f32 %v635, %v508
    %v637 = vadd.f32 %v636, %v509
    %v638 = vadd.f32 %v637, %v510
    %v639 = vadd.f32 %v638, %v511
    %v640 = vadd.f32 %v639, %v512
    %v641 = vadd.f32 %v640, %v513
    %v642 = vadd.f32 %v641, %v514
    %v643 = vadd.f32 %v642, %v515
    %v644 = vadd.f32 %v643, %v516
    %v645 = vadd.f32 %v644, %v517
    %v646 = vadd.f32 %v645, %v518
    %v647 = vadd.f32 %v646, %v519
    %v648 = vadd.f32 %v647, %v520
    %v649 = vadd.f32 %v648, %v521
    %v650 = vadd.f32 %v649, %v522
    %v651 = vadd.f32 %v650, %v523
    %v652 = vadd.f32 %v651, %v524
    %v653 = vadd.f32 %v652, %v525
    %v654 = vadd.f32 %v653, %v526
    %v655 = vadd.f32 %v654, %v527
    %v656 = vadd.f32 %v655, %v528
    %v657 = vadd.f32 %v656, %v529
    %v658 = vadd.f32 %v657, %v530
    %v659 = vadd.f32 %v658, %v531
    %v660 = vadd.f32 %v659, %v532
    %v661 = vadd.f32 %v660, %v533
    %v662 = vadd.f32 %v661, %v534
    %v663 = vadd.f32 %v662, %v535
    %v664 = vadd.f32 %v663, %v536
    %v665 = vadd.f32 %v664, %v537
    %v666 = vadd.f32 %v665, %v538
    %v667 = vadd.f32 %v666, %v539
    %v668 = vadd.f32 %v667, %v540
    %v669 = vadd.f32 %v668, %v541
    %v670 = vadd.f32 %v669, %v542
    %v671 = vadd.f32 %v670, %v543
    %v672 = vadd.f32 %v671, %v544
    %v673 = vadd.f32 %v672, %v545
    %v674 = vadd.f32 %v673, %v546
    %v675 = vadd.f32 %v674, %v547
    %v676 = vadd.f32 %v675, %v548
    %v677 = vadd.f32 %v676, %v549
    %v678 = vadd.f32 %v677, %v550
    %v679 = vadd.f32 %v678, %v551
    %v680 = vadd.f32 %v679, %v552
    %v681 = vadd.f32 %v680, %v553
    %v682 = vadd.f32 %v681, %v554
    %v683 = vadd.f32 %v682, %v555
    %v684 = vadd.f32 %v683, %v556
    %v685 = vadd.f32 %v684, %v557
    %v686 = vadd.f32 %v685, %v558
    %v687 = vadd.f32 %v686, %v559
    %v688 = vadd.f32 %v687, %v560
    %v689 = vrot.slane %v688, 4
    %v690 = vadd.f32 %v688, %v689
    %v691 = vrot.slane %v690, 2
    %v692 = vadd.f32 %v690, %v691
    %v693 = vrot.slane %v692, 1
    %v694 = vadd.f32 %v692, %v693
    %v695 = vadd.f32 %v561, %v694
    %696 = vst [vmem:[#allocation7] sm:$0x1] %v695
    // Predicated region
    $region22: #{tpu_custom_call.1} parent=1 // pred_check
      _
    $region23: #{tpu_custom_call.1} parent=1 // pred_check_branch
      %698 = sbr.rel (0) target = $region25
    $region24: #{tpu_custom_call.1} parent=1 // pred_region
      %700 = vsyncadd [#allocation4], 0
      %s702 = sshll.u32 [#allocation7], 4
      %s703 = int_to_ptr.vmem [resolvable:$true] %s702
      %s704 = sshll.u32 %s2, 4
      %s705 = int_to_ptr.hbm [resolvable:$true] %s704
      %707 = dma.vmem_to_hbm [thread:$0]  %s703, 16, %s705, [#allocation4]
    $region25: #{tpu_custom_call.1} parent=1 // pred_fallthru
      _
    // Predicated region
    $region26: #{tpu_custom_call.1} parent=1 // pred_check
      _
    $region27: #{tpu_custom_call.1} parent=1 // pred_check_branch
      %709 = sbr.rel (0) target = $region29
    $region28: #{tpu_custom_call.1} parent=1 // pred_region
      %711 = dma.done [#allocation4], 16
    $region29: #{tpu_custom_call.1} parent=1 // pred_fallthru
      _
    %712 = vsyncpa [#allocation3], 1
    %713 = vsyncpa [#allocation6], 1
    %714 = vsyncpa [#allocation4], 1

</llo_original>
